<compile_context>
chip_gen: v7x
topology: tpu7x:2x2x1
jax: 0.10.0
libtpu: 0.0.40
codegen_flags: <defaults>
</compile_context>

<pallas_src>
import jax
import jax.numpy as jnp
from jax.experimental import pallas as pl
from jax.experimental.pallas import tpu as pltpu

EPS = 1e-5


# ---------------------------------------------------------------------------
# kernels
# ---------------------------------------------------------------------------
def _bn_fold(acc, g, be):
    """Training-mode BatchNorm1d on an f32 accumulator, folded to one FMA.

    acc: (B, tn) f32, g/be: (1, tn) f32.  One-pass stats: var = E[h^2] - mean^2.
    """
    inv_b = 1.0 / acc.shape[0]
    s = jnp.sum(acc, axis=0, keepdims=True)
    s2 = jnp.sum(acc * acc, axis=0, keepdims=True)
    mean = s * inv_b
    var = s2 * inv_b - mean * mean          # biased variance (PyTorch train mode)
    scale = g * jax.lax.rsqrt(var + EPS)
    shift = be - mean * scale
    return acc * scale + shift


def _lin_bn_relu_kernel(x_ref, w_ref, g_ref, be_ref, r_ref, acc_ref):
    """r = relu(batchnorm(x @ w1)) for one feature tile j, reduction step k."""
    k = pl.program_id(1)

    @pl.when(k == 0)
    def _():
        acc_ref[...] = jnp.zeros_like(acc_ref)

    acc_ref[...] += jnp.dot(x_ref[...], w_ref[...],
                            preferred_element_type=jnp.float32)

    @pl.when(k == pl.num_programs(1) - 1)
    def _():
        h = _bn_fold(acc_ref[...], g_ref[...], be_ref[...])
        r_ref[...] = jnp.maximum(h, 0.0).astype(r_ref.dtype)


def _lin_bn_res_kernel(r_ref, w_ref, g_ref, be_ref, res_ref, o_ref, acc_ref):
    """out = batchnorm(r @ w2) + residual for one feature tile j, step k."""
    k = pl.program_id(1)

    @pl.when(k == 0)
    def _():
        acc_ref[...] = jnp.zeros_like(acc_ref)

    acc_ref[...] += jnp.dot(r_ref[...], w_ref[...],
                            preferred_element_type=jnp.float32)

    @pl.when(k == pl.num_programs(1) - 1)
    def _():
        h = _bn_fold(acc_ref[...], g_ref[...], be_ref[...])
        o_ref[...] = (h + res_ref[...].astype(jnp.float32)).astype(o_ref.dtype)


# ---------------------------------------------------------------------------
# wrapper
# ---------------------------------------------------------------------------
def _pick_tile(n, preferred):
    for t in preferred:
        if n % t == 0:
            return t
    return n  # fall back to full extent (required when n < 128: full-dim blocks)


def prepare_params(params, matmul_dtype=jnp.bfloat16):
    """One-time prep: transpose Linear weights (PyTorch stores (out,in)) and cast
    MXU operands; reshape BN affine params to (1, N) rows.  Biases b1/b2 are
    intentionally dropped: BN mean subtraction cancels them exactly."""
    N = params["w1"].shape[0]
    row = lambda p: p.reshape(1, N).astype(jnp.float32)
    return dict(
        w1_t=params["w1"].T.astype(matmul_dtype),
        w2_t=params["w2"].T.astype(matmul_dtype),
        g1=row(params["g1"]), be1=row(params["be1"]),
        g2=row(params["g2"]), be2=row(params["be2"]),
    )


def batch_resblock(x, prep):
    """x: (B, N) float32.  prep: output of prepare_params()."""
    B, N = x.shape
    mm_dtype = prep["w1_t"].dtype

    # Tile sizes: lane-dense (multiples of 128/256) when N allows, else full N.
    tn = _pick_tile(N, (256, 128))
    tk = _pick_tile(N, (512, 256, 128))
    nj, nk = N // tn, N // tk

    cparams = pltpu.CompilerParams(
        dimension_semantics=("parallel", "arbitrary"))

    x_mm = x.astype(mm_dtype)

    # ---- stage 1: r = relu(bn(x @ w1)) -------------------------------------
    r = pl.pallas_call(
        _lin_bn_relu_kernel,
        out_shape=jax.ShapeDtypeStruct((B, N), mm_dtype),
        grid_spec=pltpu.PrefetchScalarGridSpec(
            num_scalar_prefetch=0,
            grid=(nj, nk),
            in_specs=[
                pl.BlockSpec((B, tk), lambda j, k: (0, k)),    # x tile (K slice)
                pl.BlockSpec((tk, tn), lambda j, k: (k, j)),   # w1^T tile
                pl.BlockSpec((1, tn), lambda j, k: (0, j)),    # gamma1
                pl.BlockSpec((1, tn), lambda j, k: (0, j)),    # beta1
            ],
            out_specs=pl.BlockSpec((B, tn), lambda j, k: (0, j)),
            scratch_shapes=[pltpu.VMEM((B, tn), jnp.float32)],
        ),
        compiler_params=cparams,
    )(x_mm, prep["w1_t"], prep["g1"], prep["be1"])

    # ---- stage 2: out = bn(r @ w2) + x -------------------------------------
    out = pl.pallas_call(
        _lin_bn_res_kernel,
        out_shape=jax.ShapeDtypeStruct((B, N), x.dtype),
        grid_spec=pltpu.PrefetchScalarGridSpec(
            num_scalar_prefetch=0,
            grid=(nj, nk),
            in_specs=[
                pl.BlockSpec((B, tk), lambda j, k: (0, k)),    # r tile (K slice)
                pl.BlockSpec((tk, tn), lambda j, k: (k, j)),   # w2^T tile
                pl.BlockSpec((1, tn), lambda j, k: (0, j)),    # gamma2
                pl.BlockSpec((1, tn), lambda j, k: (0, j)),    # beta2
                pl.BlockSpec((B, tn), lambda j, k: (0, j)),    # residual x tile
            ],
            out_specs=pl.BlockSpec((B, tn), lambda j, k: (0, j)),
            scratch_shapes=[pltpu.VMEM((B, tn), jnp.float32)],
        ),
        compiler_params=cparams,
    )(r, prep["w2_t"], prep["g2"], prep["be2"], x)

    return out


# ---------------------------------------------------------------------------
# init + reference
# ---------------------------------------------------------------------------
def init_params(key, num_neurons):
    """Linear: uniform(-1/sqrt(N), 1/sqrt(N)); BatchNorm: gamma=1, beta=0."""
    k1, k2, k3, k4 = jax.random.split(key, 4)
    bound = 1.0 / (num_neurons ** 0.5)
    u = lambda k, shape: jax.random.uniform(k, shape, jnp.float32, -bound, bound)
    return dict(
        w1=u(k1, (num_neurons, num_neurons)),
        b1=u(k2, (num_neurons,)),
        g1=jnp.ones((num_neurons,), jnp.float32),
        be1=jnp.zeros((num_neurons,), jnp.float32),
        w2=u(k3, (num_neurons, num_neurons)),
        b2=u(k4, (num_neurons,)),
        g2=jnp.ones((num_neurons,), jnp.float32),
        be2=jnp.zeros((num_neurons,), jnp.float32),
    )


def _reference(x, p):
    """Plain-JAX reference of the PyTorch forward (train-mode BN, with biases)."""
    h1 = x @ p["w1"].T + p["b1"]
    m1 = h1.mean(0)
    v1 = ((h1 - m1) ** 2).mean(0)
    h1 = (h1 - m1) / jnp.sqrt(v1 + EPS) * p["g1"] + p["be1"]
    r = jnp.maximum(h1, 0.0)
    h2 = r @ p["w2"].T + p["b2"]
    m2 = h2.mean(0)
    v2 = ((h2 - m2) ** 2).mean(0)
    h2 = (h2 - m2) / jnp.sqrt(v2 + EPS) * p["g2"] + p["be2"]
    return h2 + x


if __name__ == "__main__":
    B, N = 8, 32  # batch=8, num_neurons=32 (small test size)
    key = jax.random.PRNGKey(0)
    kx, kp = jax.random.split(key)
    x = jax.random.normal(kx, (B, N), jnp.float32)
    params = init_params(kp, N)
    ref = _reference(x, params)

    # Exactness check: f32 MXU operands must match the f32 reference tightly
    # (bias drop / BN fold / one-pass stats are rounding-level reformulations).
    prep_f32 = prepare_params(params, matmul_dtype=jnp.float32)
    out_f32 = jax.block_until_ready(batch_resblock(x, prep_f32))
    assert out_f32.shape == (B, N)
    assert jnp.allclose(out_f32, ref, atol=1e-4, rtol=1e-4), "f32 mismatch vs reference"

    # Production path: bf16 MXU operands with f32 accumulation (loose sanity check).
    prep_bf16 = prepare_params(params, matmul_dtype=jnp.bfloat16)
    out_bf16 = jax.block_until_ready(batch_resblock(x, prep_bf16))
    assert out_bf16.shape == (B, N)
    assert jnp.allclose(out_bf16, ref, atol=1e-1, rtol=1e-1), "bf16 mismatch vs reference"

    print("KERNEL_OK")
</pallas_src>

<mosaic_0001>
module attributes {stable_mosaic.version = 11 : i64} {
  func.func @_lin_bn_relu_kernel(%arg0: i32, %arg1: i32, %arg2: memref<8x32xf32, #tpu.memory_space<vmem>>, %arg3: memref<32x32xf32, #tpu.memory_space<vmem>>, %arg4: memref<1x32xf32, #tpu.memory_space<vmem>>, %arg5: memref<1x32xf32, #tpu.memory_space<vmem>>, %arg6: memref<8x32xf32, #tpu.memory_space<vmem>>, %arg7: memref<8x32xf32, #tpu.memory_space<vmem>>) attributes {dimension_semantics = [#tpu.dimension_semantics<parallel>, #tpu.dimension_semantics<arbitrary>], iteration_bounds = array<i64: 1, 1>, scalar_prefetch = 0 : i64, scratch_operands = 1 : i64, tpu.core_type = #tpu.core_type<tc>, window_params = [{transform_indices = @transform_0, window_bounds = array<i64: 8, 32>}, {transform_indices = @transform_1, window_bounds = array<i64: 32, 32>}, {transform_indices = @transform_2, window_bounds = array<i64: 1, 32>}, {transform_indices = @transform_3, window_bounds = array<i64: 1, 32>}, {transform_indices = @transform_4, window_bounds = array<i64: 8, 32>}]} {
    %c0_i32 = arith.constant 0 : i32
    %0 = arith.cmpi eq, %arg1, %c0_i32 : i32
    %1 = arith.extui %0 : i1 to i32
    %c0_i32_0 = arith.constant 0 : i32
    %2 = arith.cmpi ne, %1, %c0_i32_0 : i32
    scf.if %2 {
      %cst_10 = arith.constant 0.000000e+00 : f32
      %12 = vector.broadcast %cst_10 : f32 to vector<8x32xf32>
      %c0_11 = arith.constant 0 : index
      %c0_12 = arith.constant 0 : index
      %13 = vector.load %arg7[%c0_11, %c0_12] : memref<8x32xf32, #tpu.memory_space<vmem>>, vector<8x32xf32>
      tpu.vector_store %arg7[%c0_11, %c0_12], %12 {strides = array<i32>} : memref<8x32xf32, #tpu.memory_space<vmem>>, vector<8x32xf32>,
    } else {
    }
    %c0 = arith.constant 0 : index
    %c0_1 = arith.constant 0 : index
    %3 = vector.load %arg7[%c0, %c0_1] : memref<8x32xf32, #tpu.memory_space<vmem>>, vector<8x32xf32>
    %c0_2 = arith.constant 0 : index
    %c0_3 = arith.constant 0 : index
    %4 = vector.load %arg2[%c0_2, %c0_3] : memref<8x32xf32, #tpu.memory_space<vmem>>, vector<8x32xf32>
    %c0_4 = arith.constant 0 : index
    %c0_5 = arith.constant 0 : index
    %5 = vector.load %arg3[%c0_4, %c0_5] : memref<32x32xf32, #tpu.memory_space<vmem>>, vector<32x32xf32>
    %cst = arith.constant dense<0.000000e+00> : vector<8x32xf32>
    %6 = tpu.matmul %4, %5, %cst {dimension_numbers = #tpu.dot_dimension_numbers<[1], [0], [0], [1], [0, 0, 1, 1], [], []>} : vector<8x32xf32>, vector<32x32xf32>, vector<8x32xf32> -> vector<8x32xf32>
    %7 = arith.addf %3, %6 : vector<8x32xf32>
    %c0_6 = arith.constant 0 : index
    %c0_7 = arith.constant 0 : index
    %8 = vector.load %arg7[%c0_6, %c0_7] : memref<8x32xf32, #tpu.memory_space<vmem>>, vector<8x32xf32>
    tpu.vector_store %arg7[%c0_6, %c0_7], %7 {strides = array<i32>} : memref<8x32xf32, #tpu.memory_space<vmem>>, vector<8x32xf32>,
    %c0_i32_8 = arith.constant 0 : i32
    %9 = arith.cmpi eq, %arg1, %c0_i32_8 : i32
    %10 = arith.extui %9 : i1 to i32
    %c0_i32_9 = arith.constant 0 : i32
    %11 = arith.cmpi ne, %10, %c0_i32_9 : i32
    scf.if %11 {
      %c0_10 = arith.constant 0 : index
      %c0_11 = arith.constant 0 : index
      %12 = vector.load %arg7[%c0_10, %c0_11] : memref<8x32xf32, #tpu.memory_space<vmem>>, vector<8x32xf32>
      %c0_12 = arith.constant 0 : index
      %c0_13 = arith.constant 0 : index
      %13 = vector.load %arg4[%c0_12, %c0_13] : memref<1x32xf32, #tpu.memory_space<vmem>>, vector<1x32xf32>
      %c0_14 = arith.constant 0 : index
      %c0_15 = arith.constant 0 : index
      %14 = vector.load %arg5[%c0_14, %c0_15] : memref<1x32xf32, #tpu.memory_space<vmem>>, vector<1x32xf32>
      %cst_16 = arith.constant dense<0.000000e+00> : vector<32xf32>
      %15 = vector.multi_reduction <add>, %12, %cst_16 [0] : vector<8x32xf32> to vector<32xf32>
      %16 = vector.shape_cast %15 : vector<32xf32> to vector<1x32xf32>
      %17 = arith.mulf %12, %12 : vector<8x32xf32>
      %cst_17 = arith.constant dense<0.000000e+00> : vector<32xf32>
      %18 = vector.multi_reduction <add>, %17, %cst_17 [0] : vector<8x32xf32> to vector<32xf32>
      %19 = vector.shape_cast %18 : vector<32xf32> to vector<1x32xf32>
      %cst_18 = arith.constant 1.250000e-01 : f32
      %20 = vector.broadcast %cst_18 : f32 to vector<1x32xf32>
      %21 = arith.mulf %16, %20 : vector<1x32xf32>
      %cst_19 = arith.constant 1.250000e-01 : f32
      %22 = vector.broadcast %cst_19 : f32 to vector<1x32xf32>
      %23 = arith.mulf %19, %22 : vector<1x32xf32>
      %24 = arith.mulf %21, %21 : vector<1x32xf32>
      %25 = arith.subf %23, %24 : vector<1x32xf32>
      %cst_20 = arith.constant 9.99999974E-6 : f32
      %26 = vector.broadcast %cst_20 : f32 to vector<1x32xf32>
      %27 = arith.addf %25, %26 : vector<1x32xf32>
      %28 = math.rsqrt %27 : vector<1x32xf32>
      %29 = arith.mulf %13, %28 : vector<1x32xf32>
      %30 = arith.mulf %21, %29 : vector<1x32xf32>
      %31 = arith.subf %14, %30 : vector<1x32xf32>
      %32 = vector.broadcast %29 : vector<1x32xf32> to vector<8x32xf32>
      %33 = arith.mulf %12, %32 : vector<8x32xf32>
      %34 = vector.broadcast %31 : vector<1x32xf32> to vector<8x32xf32>
      %35 = arith.addf %33, %34 : vector<8x32xf32>
      %cst_21 = arith.constant 0.000000e+00 : f32
      %36 = vector.broadcast %cst_21 : f32 to vector<8x32xf32>
      %37 = arith.maximumf %35, %36 : vector<8x32xf32>
      %c0_22 = arith.constant 0 : index
      %c0_23 = arith.constant 0 : index
      %38 = vector.load %arg6[%c0_22, %c0_23] : memref<8x32xf32, #tpu.memory_space<vmem>>, vector<8x32xf32>
      tpu.vector_store %arg6[%c0_22, %c0_23], %37 {strides = array<i32>} : memref<8x32xf32, #tpu.memory_space<vmem>>, vector<8x32xf32>,
    } else {
    }
    return
  }
  func.func @transform_0(%arg0: i32, %arg1: i32) -> (i32, i32) {
    %c0_i32 = arith.constant 0 : i32
    %c0_i32_0 = arith.constant 0 : i32
    return %c0_i32, %arg1 : i32, i32
  }
  func.func @transform_1(%arg0: i32, %arg1: i32) -> (i32, i32) {
    %c0_i32 = arith.constant 0 : i32
    return %arg1, %arg0 : i32, i32
  }
  func.func @transform_2(%arg0: i32, %arg1: i32) -> (i32, i32) {
    %c0_i32 = arith.constant 0 : i32
    %c0_i32_0 = arith.constant 0 : i32
    return %c0_i32, %arg0 : i32, i32
  }
  func.func @transform_3(%arg0: i32, %arg1: i32) -> (i32, i32) {
    %c0_i32 = arith.constant 0 : i32
    %c0_i32_0 = arith.constant 0 : i32
    return %c0_i32, %arg0 : i32, i32
  }
  func.func @transform_4(%arg0: i32, %arg1: i32) -> (i32, i32) {
    %c0_i32 = arith.constant 0 : i32
    %c0_i32_0 = arith.constant 0 : i32
    return %c0_i32, %arg0 : i32, i32
  }
}

</mosaic_0001>

<llo_original>
// kernel: tpu_custom_call.1
$region0: #{tpu_custom_call.1}
  #allocation0 [shape = 'u32[]', space=smem, size = 0x4, offset = 0x4, fixed_abs, tag = 'smem constant byte address 0x4 - core index']
  #allocation1 [shape = 'u32[144,128]{1,0:T(1,128)}', space=vmem, size = 0x12000, scoped, tag = 'internal scratch']
  #allocation2 [shape = 'f32[8,32]{1,0:T(8,128)}', space=vmem, size = 0x1000, scoped, tag = 'scratch operand']
  %s0 = inlined_call_operand.hbm [shape: f32[8,32], index: 0, kind: input, shape index: {}]
  %s1 = inlined_call_operand.hbm [shape: f32[32,32], index: 1, kind: input, shape index: {}]
  %s2 = inlined_call_operand.vmem [shape: f32[1,32], index: 2, kind: input, shape index: {}]
  %s3 = inlined_call_operand.vmem [shape: f32[1,32], index: 3, kind: input, shape index: {}]
  %s4 = inlined_call_operand.hbm [shape: f32[8,32], index: 4, kind: output, shape index: {}]
  %s5 = sld [smem:[#allocation0]]
  $region42: #{tpu_custom_call.1} parent=0
    _
  %s7 = ssub.s32 1, %s5
  %s8 = scalar_select 0, %s7, %s5
  $region1: #{tpu_custom_call.1} parent=0
    #allocation3 [shape = 'u8[4096]{0}', space=vmem, size = 0x1000, scoped, tag = 'input window, operand 0, single buffered']
    #allocation4 [shape = 's32[1]{0}', space=sflag, size = 0x4, scoped, tag = 'scoped memory for tpu_custom_call.1']
    #allocation5 [shape = 's32[1]{0}', space=sflag, size = 0x4, scoped, tag = 'scoped memory for tpu_custom_call.1']
    #allocation6 [shape = 'u8[16384]{0}', space=vmem, size = 0x4000, scoped, tag = 'input window, operand 1, single buffered']
    #allocation7 [shape = 's32[1]{0}', space=sflag, size = 0x4, scoped, tag = 'scoped memory for tpu_custom_call.1']
    #allocation8 [shape = 'u8[4096]{0}', space=vmem, size = 0x1000, scoped, tag = 'output window, operand 0, single buffered']
    %9 = vsyncpa [#allocation4], 0
    %10 = vsyncpa [#allocation7], 0
    %11 = vsyncpa [#allocation5], 0
    // Predicated region
    $region2: #{tpu_custom_call.1} parent=1 // pred_check
      _
    $region3: #{tpu_custom_call.1} parent=1 // pred_check_branch
      %13 = sbr.rel (0) target = $region5
    $region4: #{tpu_custom_call.1} parent=1 // pred_region
      %s15 = ssub.s32 128, 128
      %16 = vsyncadd [#allocation4], %s15
      %s18 = sshll.u32 [#allocation3], 4
      %s19 = int_to_ptr.vmem [resolvable:$true] %s18
      %21 = dma.hbm_to_vmem [thread:$0]  %s0, 128, %s19, [#allocation4]
    $region5: #{tpu_custom_call.1} parent=1 // pred_fallthru
      _
    // Predicated region
    $region6: #{tpu_custom_call.1} parent=1 // pred_check
      _
    $region7: #{tpu_custom_call.1} parent=1 // pred_check_branch
      %23 = sbr.rel (0) target = $region9
    $region8: #{tpu_custom_call.1} parent=1 // pred_region
      %s25 = ssub.s32 512, 512
      %26 = vsyncadd [#allocation7], %s25
      %s27 = sshll.u32 [#allocation6], 4
      %s28 = int_to_ptr.vmem [resolvable:$true] %s27
      %33 = dma.hbm_to_vmem [thread:$0]  %s1, 512, %s28, [#allocation7], 128, 128, 8
    $region9: #{tpu_custom_call.1} parent=1 // pred_fallthru
      _
    // Predicated region
    $region10: #{tpu_custom_call.1} parent=1 // pred_check
      _
    $region11: #{tpu_custom_call.1} parent=1 // pred_check_branch
      %35 = sbr.rel (0) target = $region13
    $region12: #{tpu_custom_call.1} parent=1 // pred_region
      _
    $region13: #{tpu_custom_call.1} parent=1 // pred_fallthru
      _
    // Predicated region
    $region14: #{tpu_custom_call.1} parent=1 // pred_check
      _
    $region15: #{tpu_custom_call.1} parent=1 // pred_check_branch
      %37 = sbr.rel (0) target = $region17
    $region16: #{tpu_custom_call.1} parent=1 // pred_region
      _
    $region17: #{tpu_custom_call.1} parent=1 // pred_fallthru
      _
    // Predicated region
    $region18: #{tpu_custom_call.1} parent=1 // pred_check
      _
    $region19: #{tpu_custom_call.1} parent=1 // pred_check_branch
      %39 = sbr.rel (0) target = $region21
    $region20: #{tpu_custom_call.1} parent=1 // pred_region
      %40 = dma.done [#allocation4], 128
    $region21: #{tpu_custom_call.1} parent=1 // pred_fallthru
      _
    // Predicated region
    $region22: #{tpu_custom_call.1} parent=1 // pred_check
      _
    $region23: #{tpu_custom_call.1} parent=1 // pred_check_branch
      %42 = sbr.rel (0) target = $region25
    $region24: #{tpu_custom_call.1} parent=1 // pred_region
      %43 = dma.done [#allocation7], 512
    $region25: #{tpu_custom_call.1} parent=1 // pred_fallthru
      _
    %p44 = scmp.eq.s32.totalorder 0, 0
    // Predicated region
    $region26: #{tpu_custom_call.1} parent=1 // pred_check
      %p45 = pneg %p44
    $region27: #{tpu_custom_call.1} parent=1 // pred_check_branch
      %47 = sbr.rel (%p45) target = $region29
    $region28: #{tpu_custom_call.1} parent=1 // pred_region
      %vm48 = vcmask 261120
      %49 = vst.msk [vmem:[#allocation2] sm:$0xff] %vm48, 0.0
    $region29: #{tpu_custom_call.1} parent=1 // pred_fallthru
      _
    %v50 = vld [vmem:[#allocation2] sm:$0xff]
    %v51 = vld [vmem:[#allocation3] sm:$0xff]
    %v52 = vld [vmem:[#allocation6] sm:$0xff]
    %v53 = vld [vmem:[#allocation6 + $0x8] sm:$0xff]
    %v54 = vld [vmem:[#allocation6 + $0x10] sm:$0xff]
    %v55 = vld [vmem:[#allocation6 + $0x18] sm:$0xff]
    %vm56 = vcmask 261120
    %v58 = vsel %vm56, %v51, 0
    %60 = vmatprep.subr.mxu0 0.0
    %61 = vmatpush1.msra.mxu0 %v52
    %62 = vmatprep.subr.mxu0 0.0
    %63 = vmatpush1.msra.mxu0 %v53
    %64 = vmatprep.subr.mxu0 0.0
    %65 = vmatpush1.msra.mxu0 %v54
    %66 = vmatprep.subr.mxu0 0.0
    %67 = vmatpush1.msra.mxu0 %v55
    %68 = vmatprep.subr.mxu0 0.0
    %69 = vmatpush1.msra.mxu0 0.0
    %70 = vmatprep.subr.mxu0 0.0
    %71 = vmatpush1.msra.mxu0 0.0
    %72 = vmatprep.subr.mxu0 0.0
    %73 = vmatpush1.msra.mxu0 0.0
    %74 = vmatprep.subr.mxu0 0.0
    %75 = vmatpush1.msra.mxu0 0.0
    %76 = vmatprep.subr.mxu0 0.0
    %77 = vmatpush1.msra.mxu0 0.0
    %78 = vmatprep.subr.mxu0 0.0
    %79 = vmatpush1.msra.mxu0 0.0
    %80 = vmatprep.subr.mxu0 0.0
    %81 = vmatpush1.msra.mxu0 0.0
    %82 = vmatprep.subr.mxu0 0.0
    %83 = vmatpush1.msra.mxu0 0.0
    %84 = vmatprep.subr.mxu0 0.0
    %85 = vmatpush1.msra.mxu0 0.0
    %86 = vmatprep.subr.mxu0 0.0
    %87 = vmatpush1.msra.mxu0 0.0
    %88 = vmatprep.subr.mxu0 0.0
    %89 = vmatpush1.msra.mxu0 0.0
    %90 = vmatprep.subr.mxu0 0.0
    %91 = vmatpush1.msra.mxu0 0.0
    %92 = vmatprep.subr.mxu0 0.0
    %93 = vmatpush1.msra.mxu0 0.0
    %94 = vmatprep.subr.mxu0 0.0
    %95 = vmatpush1.msra.mxu0 0.0
    %96 = vmatprep.subr.mxu0 0.0
    %97 = vmatpush1.msra.mxu0 0.0
    %98 = vmatprep.subr.mxu0 0.0
    %99 = vmatpush1.msra.mxu0 0.0
    %100 = vmatprep.subr.mxu0 0.0
    %101 = vmatpush1.msra.mxu0 0.0
    %102 = vmatprep.subr.mxu0 0.0
    %103 = vmatpush1.msra.mxu0 0.0
    %104 = vmatprep.subr.mxu0 0.0
    %105 = vmatpush1.msra.mxu0 0.0
    %106 = vmatprep.subr.mxu0 0.0
    %107 = vmatpush1.msra.mxu0 0.0
    %108 = vmatprep.subr.mxu0 0.0
    %109 = vmatpush1.msra.mxu0 0.0
    %110 = vmatprep.subr.mxu0 0.0
    %111 = vmatpush1.msra.mxu0 0.0
    %112 = vmatprep.subr.mxu0 0.0
    %113 = vmatpush1.msra.mxu0 0.0
    %114 = vmatprep.subr.mxu0 0.0
    %115 = vmatpush1.msra.mxu0 0.0
    %116 = vmatprep.subr.mxu0 0.0
    %117 = vmatpush1.msra.mxu0 0.0
    %118 = vmatprep.subr.mxu0 0.0
    %119 = vmatpush1.msra.mxu0 0.0
    %120 = vmatprep.subr.mxu0 0.0
    %121 = vmatpush1.msra.mxu0 0.0
    %122 = vmatprep.subr.mxu0 0.0
    %123 = vmatpush1.msra.mxu0 0.0
    %124 = vmatprep.mubr.f32.mxu0 0.0
    %125 = vmatmul.mubr.f32.gmra.mrb[0].mxu0 %v58
    %v126 = vpop.f32.mrb[0].mxu0
    %v127 = vadd.f32 0.0, %v126
    %v128 = vpop.f32.mrb[0].mxu0
    %129 = vdwg.mxu0
    %v130 = vadd.f32 %v50, %v127
    %131 = vst.msk [vmem:[#allocation2] sm:$0xff] %vm56, %v130
    // Predicated region
    $region30: #{tpu_custom_call.1} parent=1 // pred_check
      %p132 = pneg %p44
    $region31: #{tpu_custom_call.1} parent=1 // pred_check_branch
      %134 = sbr.rel (%p132) target = $region33
    $region32: #{tpu_custom_call.1} parent=1 // pred_region
      %v135 = vld [vmem:[#allocation2] sm:$0xff]
      %v136 = vld [vmem:[%s2] sm:$0x1]
      %v137 = vld [vmem:[%s3] sm:$0x1]
      %v138 = vsel %vm56, %v135, 0.0
      %v139 = vrot.slane %v138, 4
      %v140 = vadd.f32 %v138, %v139
      %v141 = vrot.slane %v140, 2
      %v142 = vadd.f32 %v140, %v141
      %v143 = vrot.slane %v142, 1
      %v144 = vadd.f32 %v142, %v143
      %v145 = vmul.f32 %v135, %v135
      %v146 = vsel %vm56, %v145, 0.0
      %v147 = vrot.slane %v146, 4
      %v148 = vadd.f32 %v146, %v147
      %v149 = vrot.slane %v148, 2
      %v150 = vadd.f32 %v148, %v149
      %v151 = vrot.slane %v150, 1
      %v152 = vadd.f32 %v150, %v151
      %v153 = vmul.f32 %v144, 0.125
      %v154 = vmul.f32 %v152, 0.125
      %v155 = vmul.f32 %v153, %v153
      %v156 = vsub.f32 %v154, %v155
      %v157 = vadd.f32 %v156, 1e-05
      %v158 = vrsqrt.pop %v157
      %v159 = vmul.f32 %v136, %v158
      %v160 = vmul.f32 %v153, %v159
      %v161 = vsub.f32 %v137, %v160
      %v163 = vlaneseq
      %v164 = vshrl.u32 %v163, 7
      %v165 = vsub.s32 0, %v164
      %v166 = vrot.slane %v159, %v165
      %v168 = vmul.f32 %v135, %v166
      %v170 = vlaneseq
      %v171 = vshrl.u32 %v170, 7
      %v172 = vsub.s32 0, %v171
      %v173 = vrot.slane %v161, %v172
      %v175 = vadd.f32 %v168, %v173
      %v176 = vmax.f32 %v175, 0.0
      %177 = vst.msk [vmem:[#allocation8] sm:$0xff] %vm56, %v176
    $region33: #{tpu_custom_call.1} parent=1 // pred_fallthru
      _
    // Predicated region
    $region34: #{tpu_custom_call.1} parent=1 // pred_check
      _
    $region35: #{tpu_custom_call.1} parent=1 // pred_check_branch
      %179 = sbr.rel (0) target = $region37
    $region36: #{tpu_custom_call.1} parent=1 // pred_region
      %s181 = ssub.s32 128, 128
      %182 = vsyncadd [#allocation5], %s181
      %s184 = sshll.u32 [#allocation8], 4
      %s185 = int_to_ptr.vmem [resolvable:$true] %s184
      %187 = dma.vmem_to_hbm [thread:$0]  %s185, 128, %s4, [#allocation5]
    $region37: #{tpu_custom_call.1} parent=1 // pred_fallthru
      _
    // Predicated region
    $region38: #{tpu_custom_call.1} parent=1 // pred_check
      _
    $region39: #{tpu_custom_call.1} parent=1 // pred_check_branch
      %189 = sbr.rel (0) target = $region41
    $region40: #{tpu_custom_call.1} parent=1 // pred_region
      %190 = dma.done [#allocation5], 128
    $region41: #{tpu_custom_call.1} parent=1 // pred_fallthru
      _
    %191 = vsyncpa [#allocation4], 1
    %192 = vsyncpa [#allocation7], 1
    %193 = vsyncpa [#allocation5], 1

</llo_original>
